<compile_context>
chip_gen: v7x
topology: tpu7x:2x2x1
jax: 0.10.0
libtpu: 0.0.40
codegen_flags: <defaults>
</compile_context>

<pallas_src>
import jax
import jax.numpy as jnp
from jax.experimental import pallas as pl
from jax.experimental.pallas import tpu as pltpu


def _netlin1x1_kernel(w_ref, x_ref, o_ref):
    """1x1 conv (no bias) on one batch element / one spatial tile.

    w_ref: VMEM (C_in, C_out) -- same block every grid step (fetched once)
    x_ref: VMEM (1, C_in, TS) -- all input channels, TS spatial lanes
    o_ref: VMEM (1, C_out, TS)
    """
    x = x_ref[0].astype(jnp.float32)                       # (C_in, TS)
    c_out = o_ref.shape[1]
    for co in range(c_out):                                # C_out == 1 for LPIPS
        w_col = w_ref[:, co:co + 1].astype(jnp.float32)    # (C_in, 1)
        # Full-tile multiply (weight broadcast along lanes) + sublane reduce:
        # all work on VPU/XLU, f32 accumulation, lane-dense (1, TS) result.
        y = jnp.sum(x * w_col, axis=0, keepdims=True)      # (1, TS)
        o_ref[0, co:co + 1, :] = y.astype(o_ref.dtype)


def net_lin_layer_forward(x_nchw, weight_oihw, *, target_block_bytes=2 << 20):
    """Forward of NetLinLayer: y = Conv2d(C_in, C_out, 1, bias=False)(x).

    x_nchw     : [N, C_in, H, W]
    weight_oihw: [C_out, C_in, 1, 1]   (PyTorch Conv2d weight layout)
    returns    : [N, C_out, H, W]
    """
    n, c_in, h, w = x_nchw.shape
    c_out = weight_oihw.shape[0]
    hw = h * w

    # Free reshapes only (no relayout of the activation):
    #   NCHW -> (N, C_in, H*W);  OIHW -> (C_in, C_out) (tiny one-time transpose).
    x3 = x_nchw.reshape(n, c_in, hw)
    w_mat = weight_oihw.reshape(c_out, c_in).T              # (C_in, C_out)

    lane = 128
    bytes_per = x3.dtype.itemsize
    # Adaptive spatial tile: ~target_block_bytes per input block, lane-aligned.
    ts = max(lane, (target_block_bytes // (bytes_per * c_in)) // lane * lane)
    if ts >= hw:
        ts = hw  # full spatial extent as one block (always a legal block shape)
    # v7x megacore: avoid a degenerate (1, 1) grid so both TensorCores get work.
    if n == 1 and ts == hw and hw >= 2 * lane:
        ts = pl.cdiv(hw, 2 * lane) * lane
    grid = (n, pl.cdiv(hw, ts))  # ragged last spatial block handled by Pallas

    y3 = pl.pallas_call(
        _netlin1x1_kernel,
        out_shape=jax.ShapeDtypeStruct((n, c_out, hw), x_nchw.dtype),
        grid_spec=pltpu.PrefetchScalarGridSpec(
            num_scalar_prefetch=0,
            grid=grid,
            in_specs=[
                # Tiny weight tile, resident (same block index every step).
                pl.BlockSpec((c_in, c_out), lambda b, s: (0, 0)),
                # Activation tile: one batch element, all channels, TS lanes.
                pl.BlockSpec((1, c_in, ts), lambda b, s: (b, 0, s)),
            ],
            out_specs=pl.BlockSpec((1, c_out, ts), lambda b, s: (b, 0, s)),
        ),
        compiler_params=pltpu.CompilerParams(
            dimension_semantics=("parallel", "parallel"),
            # ~2 MiB input block double-buffered + output + weight fits easily;
            # set the limit explicitly so tile choices stay valid on v7x (64 MiB
            # physical) and v5e (16 MiB scoped default).
            vmem_limit_bytes=32 << 20,
        ),
    )(w_mat, x3)

    return y3.reshape(n, c_out, h, w)


if __name__ == "__main__":
    key = jax.random.PRNGKey(0)
    kx, kw = jax.random.split(key)

    # Shapes implied by the module: NCHW input, conv weight (chn_out, chn_in, 1, 1)
    N, C_IN, H, W = 2, 4, 16, 16
    C_OUT = 1

    x = jax.random.normal(kx, (N, C_IN, H, W), dtype=jnp.float32)
    weight = jax.random.normal(kw, (C_OUT, C_IN, 1, 1), dtype=jnp.float32) * 0.1

    y = net_lin_layer_forward(x, weight)
    y = jax.block_until_ready(y)

    # Reference check (plain JAX 1x1 conv as a channel contraction).
    y_ref = jnp.einsum("nchw,oc->nohw", x, weight.reshape(C_OUT, C_IN))
    assert y.shape == (N, C_OUT, H, W)
    assert jnp.allclose(y, y_ref, atol=1e-5, rtol=1e-5)

    print("KERNEL_OK")
</pallas_src>

<mosaic_0001>
module attributes {stable_mosaic.version = 11 : i64} {
  func.func @_netlin1x1_kernel(%arg0: i32, %arg1: i32, %arg2: memref<4x1xf32, #tpu.memory_space<vmem>>, %arg3: memref<1x4x256xf32, #tpu.memory_space<vmem>>, %arg4: memref<1x1x256xf32, #tpu.memory_space<vmem>>) attributes {dimension_semantics = [#tpu.dimension_semantics<parallel>, #tpu.dimension_semantics<parallel>], iteration_bounds = array<i64: 2, 1>, scalar_prefetch = 0 : i64, scratch_operands = 0 : i64, tpu.core_type = #tpu.core_type<tc>, window_params = [{pipeline_mode = #tpu.pipeline_mode<synchronous>, transform_indices = @transform_0, window_bounds = array<i64: 4, 1>}, {transform_indices = @transform_1, window_bounds = array<i64: 1, 4, 256>}, {transform_indices = @transform_2, window_bounds = array<i64: 1, 1, 256>}]} {
    %c0 = arith.constant 0 : index
    %c0_0 = arith.constant 0 : index
    %c0_1 = arith.constant 0 : index
    %0 = vector.load %arg3[%c0, %c0_0, %c0_1] : memref<1x4x256xf32, #tpu.memory_space<vmem>>, vector<1x4x256xf32>
    %1 = vector.shape_cast %0 : vector<1x4x256xf32> to vector<4x256xf32>
    %c0_2 = arith.constant 0 : index
    %c0_3 = arith.constant 0 : index
    %2 = vector.load %arg2[%c0_2, %c0_3] : memref<4x1xf32, #tpu.memory_space<vmem>>, vector<4x1xf32>
    %3 = vector.broadcast %2 : vector<4x1xf32> to vector<4x256xf32>
    %4 = arith.mulf %1, %3 : vector<4x256xf32>
    %cst = arith.constant dense<0.000000e+00> : vector<256xf32>
    %5 = vector.multi_reduction <add>, %4, %cst [0] : vector<4x256xf32> to vector<256xf32>
    %6 = vector.shape_cast %5 : vector<256xf32> to vector<1x256xf32>
    %c0_4 = arith.constant 0 : index
    %c0_5 = arith.constant 0 : index
    %c0_6 = arith.constant 0 : index
    %7 = vector.load %arg4[%c0_4, %c0_5, %c0_6] : memref<1x1x256xf32, #tpu.memory_space<vmem>>, vector<1x1x256xf32>
    %8 = vector.shape_cast %7 : vector<1x1x256xf32> to vector<1x256xf32>
    %9 = vector.shape_cast %6 : vector<1x256xf32> to vector<1x1x256xf32>
    tpu.vector_store %arg4[%c0_4, %c0_5, %c0_6], %9 {strides = array<i32>} : memref<1x1x256xf32, #tpu.memory_space<vmem>>, vector<1x1x256xf32>,
    return
  }
  func.func @transform_0(%arg0: i32, %arg1: i32) -> (i32, i32) {
    %c0_i32 = arith.constant 0 : i32
    %c0_i32_0 = arith.constant 0 : i32
    %c0_i32_1 = arith.constant 0 : i32
    return %c0_i32, %c0_i32_0 : i32, i32
  }
  func.func @transform_1(%arg0: i32, %arg1: i32) -> (i32, i32, i32) {
    %c0_i32 = arith.constant 0 : i32
    %c0_i32_0 = arith.constant 0 : i32
    return %arg0, %c0_i32, %arg1 : i32, i32, i32
  }
  func.func @transform_2(%arg0: i32, %arg1: i32) -> (i32, i32, i32) {
    %c0_i32 = arith.constant 0 : i32
    %c0_i32_0 = arith.constant 0 : i32
    return %arg0, %c0_i32, %arg1 : i32, i32, i32
  }
}

</mosaic_0001>

<llo_original>
// kernel: tpu_custom_call.1
$region0: #{tpu_custom_call.1}
  #allocation0 [shape = 'u32[]', space=smem, size = 0x4, offset = 0x4, fixed_abs, tag = 'smem constant byte address 0x4 - core index']
  #allocation1 [shape = 'u32[144,128]{1,0:T(1,128)}', space=vmem, size = 0x12000, scoped, tag = 'internal scratch']
  %s0 = inlined_call_operand.vmem [shape: f32[4,1], index: 0, kind: input, shape index: {}]
  %s1 = inlined_call_operand.hbm [shape: f32[2,4,256], index: 1, kind: input, shape index: {}]
  %s2 = inlined_call_operand.hbm [shape: f32[2,1,256], index: 2, kind: output, shape index: {}]
  %s3 = sld [smem:[#allocation0]]
  $region45: #{tpu_custom_call.1} parent=0
    _
  %s5 = ssub.s32 1, %s3
  %s6 = scalar_select 0, %s5, %s3
  $region1: #{tpu_custom_call.1} parent=0
    #allocation2 [shape = 'u8[8192]{0}', space=vmem, size = 0x2000, scoped, tag = 'input window, operand 1']
    #allocation3 [shape = 's32[2]{0}', space=sflag, size = 0x8, scoped, tag = 'scoped memory for tpu_custom_call.1']
    #allocation4 [shape = 's32[2]{0}', space=sflag, size = 0x8, scoped, tag = 'scoped memory for tpu_custom_call.1']
    #allocation5 [shape = 'u8[2048]{0}', space=vmem, size = 0x800, scoped, tag = 'output window, operand 0']
    %7 = vsyncpa [#allocation3], 0
    %s8 = scalar_lea.sflag [#allocation3], 1
    %9 = vsyncpa %s8, 0
    %10 = vsyncpa [#allocation4], 0
    %s11 = scalar_lea.sflag [#allocation4], 1
    %12 = vsyncpa %s11, 0
    loop: start=0, step=1, limit=4
    $region2: #{tpu_custom_call.1} parent=1 // loop_pre_header
      _
    $region3: #{tpu_custom_call.1} parent=1 // loop_header
      %s14 = sphi 0, %s18
      %p15 = scmp.ge.s32.totalorder %s14, 4
      %s21 = sphi 0, %s33
      %s22 = sphi 0, %s29
      %s23 = sphi 0, %s21
      %s24 = sphi 0, %s22
      %s25 = sphi 0, %s23
      %s26 = sphi 0, %s24
      %s34 = sphi 0, %s34
      %s36 = sphi 0, %s34
      %s37 = sphi 0, %s36
      %s51 = sphi 0, %s37
      %s59 = sphi 0, %s61
      %s62 = sphi 0, %s59
      %s63 = sphi 0, %s62
      %s79 = sphi 0, %s63
      %s87 = sphi 0, %s89
      %s90 = sphi 0, %s87
      %s91 = sphi 0, %s90
      %s107 = sphi 0, %s91
    $region4: #{tpu_custom_call.1} parent=1 // loop_header_branch
      %17 = sbr.rel (%p15) target = $region8
    $region5: #{tpu_custom_call.1} parent=1 // loop_body
      %s19 = ssub.s32 %s14, 1
      %s20 = ssub.s32 %s14, 2
      %s27 = sadd.s32 1, %s22
      %p28 = scmp.ge.s32.totalorder %s27, 1
      %s29 = scalar_select %p28, 0, %s27
      %s30 = sadd.s32 1, %s21
      %s31 = scalar_select %p28, %s30, %s21
      %p32 = scmp.ge.s32.totalorder %s31, 2
      %s33 = scalar_select %p32, 0, %s31
      %s35 = sadd.s32 %s34, 1
      %p38 = scmp.eq.s32.totalorder %s14, 1
      %p39 = scmp.ne.s32.totalorder %s34, %s36
      %p40 = scmp.eq.s32.totalorder %s14, 0
      %p41 = por %p39, %p40
      %p42 = scmp.ne.s32.totalorder %s34, %s36
      %p43 = scmp.eq.s32.totalorder %s19, 1
      %p44 = por %p42, %p43
      %p45 = scmp.ne.s32.totalorder %s36, %s37
      %p46 = scmp.eq.s32.totalorder %s19, 0
      %p47 = por %p45, %p46
      %p48 = scmp.ne.s32.totalorder %s36, %s37
      %p49 = scmp.eq.s32.totalorder %s20, 1
      %p50 = por %p48, %p49
      %p52 = scmp.ne.s32.totalorder %s37, %s51
      %p53 = scmp.eq.s32.totalorder %s20, 0
      %p54 = por %p52, %p53
      %s55 = ssub.s32 %s21, %s33
      %s56 = ssub.s32 %s22, %s29
      %s57 = sor.u32 %s55, %s56
      %p58 = scmp.eq.s32.totalorder %s57, 0
      %s60 = sadd.s32 %s59, 1
      %s61 = scalar_select %p58, %s59, %s60
      %p64 = pneg %p58
      %p65 = scmp.eq.s32.totalorder %s14, 1
      %p66 = por %p64, %p65
      %p67 = scmp.ne.s32.totalorder %s59, %s62
      %p68 = scmp.eq.s32.totalorder %s14, 0
      %p69 = por %p67, %p68
      %p70 = scmp.ne.s32.totalorder %s59, %s62
      %p71 = scmp.eq.s32.totalorder %s19, 1
      %p72 = por %p70, %p71
      %p73 = scmp.ne.s32.totalorder %s62, %s63
      %p74 = scmp.eq.s32.totalorder %s19, 0
      %p75 = por %p73, %p74
      %p76 = scmp.ne.s32.totalorder %s62, %s63
      %p77 = scmp.eq.s32.totalorder %s20, 1
      %p78 = por %p76, %p77
      %p80 = scmp.ne.s32.totalorder %s63, %s79
      %p81 = scmp.eq.s32.totalorder %s20, 0
      %p82 = por %p80, %p81
      %s83 = ssub.s32 %s21, %s33
      %s84 = ssub.s32 %s22, %s29
      %s85 = sor.u32 %s83, %s84
      %p86 = scmp.eq.s32.totalorder %s85, 0
      %s88 = sadd.s32 %s87, 1
      %s89 = scalar_select %p86, %s87, %s88
      %p92 = pneg %p86
      %p93 = scmp.eq.s32.totalorder %s14, 1
      %p94 = por %p92, %p93
      %p95 = scmp.ne.s32.totalorder %s87, %s90
      %p96 = scmp.eq.s32.totalorder %s14, 0
      %p97 = por %p95, %p96
      %p98 = scmp.ne.s32.totalorder %s87, %s90
      %p99 = scmp.eq.s32.totalorder %s19, 1
      %p100 = por %p98, %p99
      %p101 = scmp.ne.s32.totalorder %s90, %s91
      %p102 = scmp.eq.s32.totalorder %s19, 0
      %p103 = por %p101, %p102
      %p104 = scmp.ne.s32.totalorder %s90, %s91
      %p105 = scmp.eq.s32.totalorder %s20, 1
      %p106 = por %p104, %p105
      %p108 = scmp.ne.s32.totalorder %s91, %s107
      %p109 = scmp.eq.s32.totalorder %s20, 0
      %p110 = por %p108, %p109
      %p111 = scmp.le.s32.totalorder 1, %s14
      %p112 = scmp.lt.s32.totalorder %s14, 3
      %p113 = pnand %p111, %p112
      %p114 = pneg %p113
      // Predicated region
      $region9: #{tpu_custom_call.1} parent=5 // pred_check
        _
      $region10: #{tpu_custom_call.1} parent=5 // pred_check_branch
        %116 = sbr.rel (%p113) target = $region12
      $region11: #{tpu_custom_call.1} parent=5 // pred_region
        %s117 = ssub.s32 %s14, 1
        // Predicated region
        $region13: #{tpu_custom_call.1} parent=11 // pred_check
          %p118 = pneg %p47
        $region14: #{tpu_custom_call.1} parent=11 // pred_check_branch
          %120 = sbr.rel (%p118) target = $region16
        $region15: #{tpu_custom_call.1} parent=11 // pred_region
          _
        $region16: #{tpu_custom_call.1} parent=11 // pred_fallthru
          _
      $region12: #{tpu_custom_call.1} parent=5 // pred_fallthru
        _
      %p121 = scmp.lt.s32.totalorder %s14, 2
      // Predicated region
      $region17: #{tpu_custom_call.1} parent=5 // pred_check
        %p122 = pneg %p121
      $region18: #{tpu_custom_call.1} parent=5 // pred_check_branch
        %124 = sbr.rel (%p122) target = $region20
      $region19: #{tpu_custom_call.1} parent=5 // pred_region
        // Predicated region
        $region21: #{tpu_custom_call.1} parent=19 // pred_check
          %p125 = pneg %p69
        $region22: #{tpu_custom_call.1} parent=19 // pred_check_branch
          %127 = sbr.rel (%p125) target = $region24
        $region23: #{tpu_custom_call.1} parent=19 // pred_region
          %s128 = sand.u32 %s59, 1
          %s129 = scalar_lea.sflag [#allocation3], %s128
          %s130 = sand.u32 %s59, 1
          %s131 = smul.addr %s130, 8
          %s132 = scalar_lea.vmem [#allocation2], %s131
          %s133 = smul.u32 2, %s22
          %s135 = ssub.s32 128, 128
          %136 = vsyncadd %s129, %s135
          %s137 = smul.addr %s21, 2
          %s138 = sadd.s32 %s133, %s137
          %s139 = smul.addr %s138, 64
          %s140 = scalar_lea.hbm %s1, %s139
          %s142 = sshll.u32 %s132, 4
          %s143 = int_to_ptr.vmem [resolvable:$true] %s142
          %145 = dma.hbm_to_vmem [thread:$0]  %s140, 128, %s143, %s129
        $region24: #{tpu_custom_call.1} parent=19 // pred_fallthru
          _
      $region20: #{tpu_custom_call.1} parent=5 // pred_fallthru
        _
      %p146 = scmp.le.s32.totalorder 1, %s14
      %p147 = scmp.lt.s32.totalorder %s14, 3
      %p148 = pnand %p146, %p147
      %p149 = pneg %p148
      // Predicated region
      $region25: #{tpu_custom_call.1} parent=5 // pred_check
        _
      $region26: #{tpu_custom_call.1} parent=5 // pred_check_branch
        %151 = sbr.rel (%p148) target = $region28
      $region27: #{tpu_custom_call.1} parent=5 // pred_region
        %s152 = ssub.s32 %s14, 1
        %s153 = sand.u32 %s62, 1
        %s154 = scalar_lea.sflag [#allocation3], %s153
        %s155 = sand.u32 %s62, 1
        %s156 = smul.addr %s155, 8
        %s157 = scalar_lea.vmem [#allocation2], %s156
        // Predicated region
        $region29: #{tpu_custom_call.1} parent=27 // pred_check
          %p158 = pneg %p75
        $region30: #{tpu_custom_call.1} parent=27 // pred_check_branch
          %160 = sbr.rel (%p158) target = $region32
        $region31: #{tpu_custom_call.1} parent=27 // pred_region
          %161 = dma.done %s154, 128
        $region32: #{tpu_custom_call.1} parent=27 // pred_fallthru
          _
        %p162 = pneg %p47
        %p163 = pneg %p44
        %s164 = sand.u32 %s62, 1
        %s165 = scalar_lea.sflag [#allocation3], %s164
        %s166 = sand.u32 %s62, 1
        %s167 = smul.addr %s166, 8
        %s168 = scalar_lea.vmem [#allocation2], %s167
        %p169 = pneg %p75
        %p170 = pneg %p72
        %p171 = pneg %p103
        %p172 = pneg %p100
        %s173 = sand.u32 %s90, 1
        %s174 = scalar_lea.sflag [#allocation4], %s173
        %s175 = sand.u32 %s90, 1
        %s176 = smul.addr %s175, 2
        %s177 = scalar_lea.vmem [#allocation5], %s176
        %s178 = smul.u32 2, %s24
        %s179 = smul.u32 2, %s24
        %v180 = vld [vmem:[%s157] sm:$0xff]
        %v181 = vld [vmem:[%s0] sm:$0xf]
        %183 = vset.pattern.permute.xlu0 0
        %184 = vperm.xlu0 %183, %v181
        %v185 = vpop.permute.xlu0 %184
        %v187 = vunpack.c.l.s4 839922192
        %v188 = vunpack.c.0.s8 %v187
        %v189 = vlaneseq
        %v190 = vshrl.u32 %v189, 7
        %v191 = vsub.s32 %v188, %v190
        %v192 = vrot.slane %v185, %v191
        %v194 = vmul.f32 %v180, %v192
        %v196 = vcombine.high %v194, %v194
        %vm198 = vcmask 1043456
        %v199 = vsel %vm198, %v194, 0.0
        %v200 = vrot.slane %v199, 4
        %v201 = vadd.f32 %v199, %v200
        %v202 = vrot.slane %v201, 2
        %v203 = vadd.f32 %v201, %v202
        %v204 = vrot.slane %v203, 1
        %v205 = vadd.f32 %v203, %v204
        %v206 = vsel %vm198, %v196, 0.0
        %v207 = vrot.slane %v206, 4
        %v208 = vadd.f32 %v206, %v207
        %v209 = vrot.slane %v208, 2
        %v210 = vadd.f32 %v208, %v209
        %v211 = vrot.slane %v210, 1
        %v212 = vadd.f32 %v210, %v211
        %v215 = vcombine.low %v205, %v212
        %v217 = vunpack.c.l.s4 1966171168
        %v218 = vunpack.c.0.s8 %v217
        %v219 = vlaneseq
        %v220 = vshrl.u32 %v219, 7
        %v221 = vsub.s32 %v218, %v220
        %v222 = vrot.slane %v215, %v221
        %v224 = vunpack.c.l.s4 1966171168
        %v225 = vunpack.c.0.s8 %v224
        %v226 = vlaneseq
        %v227 = vshrl.u32 %v226, 7
        %v228 = vsub.s32 %v225, %v227
        %v229 = vrot.slane %v222, %v228
        %v231 = vlaneseq
        %vm232 = vcmp.ge.s32.totalorder %v231, 0
        %vm233 = vcmp.lt.s32.totalorder %v231, 256
        %vm234 = vmand %vm232, %vm233
        %235 = vst.msk [vmem:[%s177] sm:$0x3] %vm234, %v229
        %s236 = sand.u32 %s90, 1
        %s237 = scalar_lea.sflag [#allocation4], %s236
        %s238 = sand.u32 %s90, 1
        %s239 = smul.addr %s238, 2
        %s240 = scalar_lea.vmem [#allocation5], %s239
        // Predicated region
        $region33: #{tpu_custom_call.1} parent=27 // pred_check
          %p241 = pneg %p100
        $region34: #{tpu_custom_call.1} parent=27 // pred_check_branch
          %243 = sbr.rel (%p241) target = $region36
        $region35: #{tpu_custom_call.1} parent=27 // pred_region
          %s244 = smul.u32 2, %s24
          %s246 = ssub.s32 32, 32
          %247 = vsyncadd %s237, %s246
          %s248 = smul.addr %s23, 2
          %s249 = sadd.s32 %s244, %s248
          %s250 = smul.addr %s249, 16
          %s251 = scalar_lea.hbm %s2, %s250
          %s253 = sshll.u32 %s240, 4
          %s254 = int_to_ptr.vmem [resolvable:$true] %s253
          %256 = dma.vmem_to_hbm [thread:$0]  %s254, 32, %s251, %s237
        $region36: #{tpu_custom_call.1} parent=27 // pred_fallthru
          _
      $region28: #{tpu_custom_call.1} parent=5 // pred_fallthru
        _
      %p257 = scmp.le.s32.totalorder 2, %s14
      // Predicated region
      $region37: #{tpu_custom_call.1} parent=5 // pred_check
        %p258 = pneg %p257
      $region38: #{tpu_custom_call.1} parent=5 // pred_check_branch
        %260 = sbr.rel (%p258) target = $region40
      $region39: #{tpu_custom_call.1} parent=5 // pred_region
        %s261 = ssub.s32 %s14, 2
        // Predicated region
        $region41: #{tpu_custom_call.1} parent=39 // pred_check
          %p262 = pneg %p106
        $region42: #{tpu_custom_call.1} parent=39 // pred_check_branch
          %264 = sbr.rel (%p262) target = $region44
        $region43: #{tpu_custom_call.1} parent=39 // pred_region
          %s265 = sand.u32 %s91, 1
          %s266 = scalar_lea.sflag [#allocation4], %s265
          %s267 = sand.u32 %s91, 1
          %s268 = smul.addr %s267, 2
          %s269 = scalar_lea.vmem [#allocation5], %s268
          %270 = dma.done %s266, 32
        $region44: #{tpu_custom_call.1} parent=39 // pred_fallthru
          _
      $region40: #{tpu_custom_call.1} parent=5 // pred_fallthru
        _
    $region6: #{tpu_custom_call.1} parent=1 // loop_footer
      %s18 = sadd.s32 1, %s14
    $region7: #{tpu_custom_call.1} parent=1 // loop_footer_branch
      %13 = sbr.rel target = $region3
    $region8: #{tpu_custom_call.1} parent=1 // loop_exit
      _
    %271 = vsyncpa [#allocation3], 1
    %s272 = scalar_lea.sflag [#allocation3], 1
    %273 = vsyncpa %s272, 1
    %274 = vsyncpa [#allocation4], 1
    %s275 = scalar_lea.sflag [#allocation4], 1
    %276 = vsyncpa %s275, 1

</llo_original>
